<compile_context>
chip_gen: v6e
topology: v6e:2x2x1
jax: 0.10.0
libtpu: 0.0.40
codegen_flags: <defaults>
</compile_context>

<pallas_src>
import math

import jax
import jax.numpy as jnp
from jax.experimental import pallas as pl
from jax.experimental.pallas import tpu as pltpu


# ----------------------------- in-kernel helpers -----------------------------

def _gelu_tanh(x):
    c = math.sqrt(2.0 / math.pi)
    return 0.5 * x * (1.0 + jnp.tanh(c * (x + 0.044715 * x * x * x)))


# --------------------------------- kernel ------------------------------------

def mlp_kernel(x_ref, fc_w_ref, fc_b_ref, pj_w_ref, pj_b_ref, o_ref):
    # grid = (row_tiles, hidden_tiles); hidden axis is the reduction axis.
    # o_ref (f32) is resident across the hidden axis and used as accumulator.
    j = pl.program_id(1)

    @pl.when(j == 0)
    def _init():
        o_ref[...] = jnp.zeros_like(o_ref)

    # fc: (tm, C)bf16 x (C, th)bf16 -> (tm, th) f32 on the MXU.
    h = jnp.dot(x_ref[...], fc_w_ref[...], preferred_element_type=jnp.float32)
    h = h + fc_b_ref[0]                    # bias + GELU stay in f32
    h = _gelu_tanh(h)

    # embd_proj partial contraction: (tm, th) x (th, C) -> accumulate (tm, C).
    o_ref[...] += jnp.dot(h.astype(jnp.bfloat16), pj_w_ref[...],
                          preferred_element_type=jnp.float32)

    @pl.when(j == pl.num_programs(1) - 1)
    def _finalize():
        # dropout: identity in eval mode
        o_ref[...] += pj_b_ref[0]


# -------------------------------- wrapper ------------------------------------

def _pick_hidden_tile(H, target):
    """Largest multiple-of-128 divisor of H that is <= target, else H."""
    if H <= target:
        return H
    best = None
    t = 128
    while t <= target:
        if H % t == 0:
            best = t
        t += 128
    return best if best is not None else H   # TODO(synk): pad H for awkward sizes


def mlp(x, params, *, block_rows=1024, block_hidden=512):
    """x: (..., C).  params: PyTorch-layout fc/pj weights and biases."""
    orig_shape = x.shape
    orig_dtype = x.dtype
    C = orig_shape[-1]
    M = 1
    for d in orig_shape[:-1]:
        M *= d
    H = params["fc_w"].shape[0]            # 4 * C

    # Cast activations ONCE wrapper-side (bf16 MXU operand, halves x DMA).
    x2 = x.reshape(M, C).astype(jnp.bfloat16)

    # PyTorch nn.Linear stores W as (out, in); kernel consumes (in, out).
    fc_w_t = params["fc_w"].T.astype(jnp.bfloat16)      # (C, H)
    pj_w_t = params["pj_w"].T.astype(jnp.bfloat16)      # (H, C)
    fc_b = params["fc_b"].reshape(1, H).astype(jnp.float32)
    pj_b = params["pj_b"].reshape(1, C).astype(jnp.float32)

    # ---------------- generation-aware VMEM budget ----------------
    try:
        vmem_phys = int(pltpu.get_tpu_info().vmem_capacity_bytes)
    except Exception:
        vmem_phys = 64 << 20                # conservative (v7x-sized) fallback
    vmem_cap = max(vmem_phys - (16 << 20), 32 << 20)   # leave compiler headroom

    # ---------------- tile selection ----------------
    th = _pick_hidden_tile(H, block_hidden)

    tm = min(block_rows, M)
    if tm < M:
        tm = max(8, (tm // 8) * 8)          # sublane-aligned partial-row tile

    def vmem_bytes(tm_, th_):
        per_step = (tm_ * C * 2        # x tile (bf16)
                    + C * th_ * 2      # fc_w block (bf16)
                    + th_ * 4          # fc_b block
                    + th_ * C * 2      # pj_w block (bf16)
                    + C * 4            # pj_b
                    + tm_ * C * 4)     # out tile (f32 accumulator, resident)
        # double-buffered I/O + (tm, th) f32 GELU intermediate + margin
        return 2 * per_step + tm_ * th_ * 4 + (2 << 20)

    # Shrink the row tile until the double-buffered working set fits.
    while tm > 8 and vmem_bytes(tm, th) > vmem_cap:
        tm = max(8, (tm // 2 // 8) * 8)

    grid = (pl.cdiv(M, tm), H // th)
    vmem_limit = int(min(max(vmem_bytes(tm, th), 8 << 20), vmem_cap))

    out = pl.pallas_call(
        mlp_kernel,
        out_shape=jax.ShapeDtypeStruct((M, C), jnp.float32),
        grid_spec=pltpu.PrefetchScalarGridSpec(
            num_scalar_prefetch=0,
            grid=grid,
            in_specs=[
                pl.BlockSpec((tm, C), lambda i, j: (i, 0)),   # x rows (bf16)
                pl.BlockSpec((C, th), lambda i, j: (0, j)),   # fc_w K-block
                pl.BlockSpec((1, th), lambda i, j: (0, j)),   # fc_b K-block
                pl.BlockSpec((th, C), lambda i, j: (j, 0)),   # pj_w K-block
                pl.BlockSpec((1, C), lambda i, j: (0, 0)),    # pj_b
            ],
            out_specs=pl.BlockSpec((tm, C), lambda i, j: (i, 0)),
        ),
        compiler_params=pltpu.CompilerParams(
            dimension_semantics=("parallel", "arbitrary"),
            vmem_limit_bytes=vmem_limit,
        ),
    )(x2, fc_w_t, fc_b, pj_w_t, pj_b)

    return out.astype(orig_dtype).reshape(orig_shape)


# ------------------------- pure-JAX references (check) ------------------------

def mlp_ref_bf16(x, params):
    """Mirrors the kernel numerics: bf16 matmul operands, f32 accumulation."""
    h = jnp.dot(x.astype(jnp.bfloat16), params["fc_w"].T.astype(jnp.bfloat16),
                preferred_element_type=jnp.float32) + params["fc_b"]
    h = _gelu_tanh(h)
    y = jnp.dot(h.astype(jnp.bfloat16), params["pj_w"].T.astype(jnp.bfloat16),
                preferred_element_type=jnp.float32) + params["pj_b"]
    return y


def mlp_ref_f32(x, params):
    """Full-f32 reference matching the PyTorch module semantics."""
    h = x @ params["fc_w"].T + params["fc_b"]
    h = _gelu_tanh(h)
    return h @ params["pj_w"].T + params["pj_b"]


# ---------------------------------- main --------------------------------------

if __name__ == "__main__":
    B, T, C = 2, 8, 32                       # batch, seq, n_embd (config.bias=True)
    H = 4 * C
    key = jax.random.PRNGKey(0)
    ks = jax.random.split(key, 5)

    def init(k, shape, scale=0.05):
        return (scale * jax.random.normal(k, shape)).astype(jnp.float32)

    params = {
        "fc_w": init(ks[0], (H, C)),         # PyTorch layout: (out, in)
        "fc_b": init(ks[1], (H,)),
        "pj_w": init(ks[2], (C, H)),
        "pj_b": init(ks[3], (C,)),
    }

    x = jax.random.normal(ks[4], (B, T, C), dtype=jnp.float32)

    out = mlp(x, params)
    out = jax.block_until_ready(out)
    assert out.shape == (B, T, C)

    ref_bf16 = mlp_ref_bf16(x, params)
    err = float(jnp.max(jnp.abs(out - ref_bf16)))
    assert jnp.allclose(out, ref_bf16, rtol=1e-4, atol=1e-4), err

    # Sanity vs. full-f32 semantics (looser tolerance due to bf16 operands).
    ref_f32 = mlp_ref_f32(x, params)
    assert jnp.allclose(out, ref_f32, rtol=5e-2, atol=5e-3), \
        float(jnp.max(jnp.abs(out - ref_f32)))

    print("KERNEL_OK")
</pallas_src>

<mosaic_0001>
module attributes {stable_mosaic.version = 11 : i64} {
  func.func @mlp_kernel(%arg0: i32, %arg1: i32, %arg2: memref<16x32xbf16, #tpu.memory_space<vmem>>, %arg3: memref<32x128xbf16, #tpu.memory_space<vmem>>, %arg4: memref<1x128xf32, #tpu.memory_space<vmem>>, %arg5: memref<128x32xbf16, #tpu.memory_space<vmem>>, %arg6: memref<1x32xf32, #tpu.memory_space<vmem>>, %arg7: memref<16x32xf32, #tpu.memory_space<vmem>>) attributes {dimension_semantics = [#tpu.dimension_semantics<parallel>, #tpu.dimension_semantics<arbitrary>], iteration_bounds = array<i64: 1, 1>, scalar_prefetch = 0 : i64, scratch_operands = 0 : i64, tpu.core_type = #tpu.core_type<tc>, window_params = [{transform_indices = @transform_0, window_bounds = array<i64: 16, 32>}, {transform_indices = @transform_1, window_bounds = array<i64: 32, 128>}, {transform_indices = @transform_2, window_bounds = array<i64: 1, 128>}, {transform_indices = @transform_3, window_bounds = array<i64: 128, 32>}, {pipeline_mode = #tpu.pipeline_mode<synchronous>, transform_indices = @transform_4, window_bounds = array<i64: 1, 32>}, {transform_indices = @transform_5, window_bounds = array<i64: 16, 32>}]} {
    %c0_i32 = arith.constant 0 : i32
    %0 = arith.cmpi eq, %arg1, %c0_i32 : i32
    %1 = arith.extui %0 : i1 to i32
    %c0_i32_0 = arith.constant 0 : i32
    %2 = arith.cmpi ne, %1, %c0_i32_0 : i32
    scf.if %2 {
      %cst_19 = arith.constant 0.000000e+00 : f32
      %33 = vector.broadcast %cst_19 : f32 to vector<16x32xf32>
      %c0_20 = arith.constant 0 : index
      %c0_21 = arith.constant 0 : index
      %34 = vector.load %arg7[%c0_20, %c0_21] : memref<16x32xf32, #tpu.memory_space<vmem>>, vector<16x32xf32>
      tpu.vector_store %arg7[%c0_20, %c0_21], %33 {strides = array<i32>} : memref<16x32xf32, #tpu.memory_space<vmem>>, vector<16x32xf32>,
    } else {
    }
    %c0 = arith.constant 0 : index
    %c0_1 = arith.constant 0 : index
    %3 = vector.load %arg2[%c0, %c0_1] : memref<16x32xbf16, #tpu.memory_space<vmem>>, vector<16x32xbf16>
    %c0_2 = arith.constant 0 : index
    %c0_3 = arith.constant 0 : index
    %4 = vector.load %arg3[%c0_2, %c0_3] : memref<32x128xbf16, #tpu.memory_space<vmem>>, vector<32x128xbf16>
    %cst = arith.constant dense<0.000000e+00> : vector<16x128xf32>
    %5 = tpu.matmul %3, %4, %cst {dimension_numbers = #tpu.dot_dimension_numbers<[1], [0], [0], [1], [0, 0, 1, 1], [], []>} : vector<16x32xbf16>, vector<32x128xbf16>, vector<16x128xf32> -> vector<16x128xf32>
    %c0_4 = arith.constant 0 : index
    %c0_5 = arith.constant 0 : index
    %6 = vector.load %arg4[%c0_4, %c0_5] : memref<1x128xf32, #tpu.memory_space<vmem>>, vector<1x128xf32>
    %7 = vector.shape_cast %6 : vector<1x128xf32> to vector<128xf32>
    %8 = vector.shape_cast %7 : vector<128xf32> to vector<1x128xf32>
    %9 = vector.broadcast %8 : vector<1x128xf32> to vector<16x128xf32>
    %10 = arith.addf %5, %9 : vector<16x128xf32>
    %cst_6 = arith.constant 5.000000e-01 : f32
    %11 = vector.broadcast %cst_6 : f32 to vector<16x128xf32>
    %12 = arith.mulf %11, %10 : vector<16x128xf32>
    %cst_7 = arith.constant 4.471500e-02 : f32
    %13 = vector.broadcast %cst_7 : f32 to vector<16x128xf32>
    %14 = arith.mulf %13, %10 : vector<16x128xf32>
    %15 = arith.mulf %14, %10 : vector<16x128xf32>
    %16 = arith.mulf %15, %10 : vector<16x128xf32>
    %17 = arith.addf %10, %16 : vector<16x128xf32>
    %cst_8 = arith.constant 0.797884583 : f32
    %18 = vector.broadcast %cst_8 : f32 to vector<16x128xf32>
    %19 = arith.mulf %18, %17 : vector<16x128xf32>
    %20 = math.tanh %19 : vector<16x128xf32>
    %cst_9 = arith.constant 1.000000e+00 : f32
    %21 = vector.broadcast %cst_9 : f32 to vector<16x128xf32>
    %22 = arith.addf %21, %20 : vector<16x128xf32>
    %23 = arith.mulf %12, %22 : vector<16x128xf32>
    %c0_10 = arith.constant 0 : index
    %c0_11 = arith.constant 0 : index
    %24 = vector.load %arg7[%c0_10, %c0_11] : memref<16x32xf32, #tpu.memory_space<vmem>>, vector<16x32xf32>
    %25 = arith.truncf %23 : vector<16x128xf32> to vector<16x128xbf16>
    %c0_12 = arith.constant 0 : index
    %c0_13 = arith.constant 0 : index
    %26 = vector.load %arg5[%c0_12, %c0_13] : memref<128x32xbf16, #tpu.memory_space<vmem>>, vector<128x32xbf16>
    %cst_14 = arith.constant dense<0.000000e+00> : vector<16x32xf32>
    %27 = tpu.matmul %25, %26, %cst_14 {dimension_numbers = #tpu.dot_dimension_numbers<[1], [0], [0], [1], [0, 0, 1, 1], [], []>} : vector<16x128xbf16>, vector<128x32xbf16>, vector<16x32xf32> -> vector<16x32xf32>
    %28 = arith.addf %24, %27 : vector<16x32xf32>
    %c0_15 = arith.constant 0 : index
    %c0_16 = arith.constant 0 : index
    %29 = vector.load %arg7[%c0_15, %c0_16] : memref<16x32xf32, #tpu.memory_space<vmem>>, vector<16x32xf32>
    tpu.vector_store %arg7[%c0_15, %c0_16], %28 {strides = array<i32>} : memref<16x32xf32, #tpu.memory_space<vmem>>, vector<16x32xf32>,
    %c0_i32_17 = arith.constant 0 : i32
    %30 = arith.cmpi eq, %arg1, %c0_i32_17 : i32
    %31 = arith.extui %30 : i1 to i32
    %c0_i32_18 = arith.constant 0 : i32
    %32 = arith.cmpi ne, %31, %c0_i32_18 : i32
    scf.if %32 {
      %c0_19 = arith.constant 0 : index
      %c0_20 = arith.constant 0 : index
      %33 = vector.load %arg7[%c0_19, %c0_20] : memref<16x32xf32, #tpu.memory_space<vmem>>, vector<16x32xf32>
      %c0_21 = arith.constant 0 : index
      %c0_22 = arith.constant 0 : index
      %34 = vector.load %arg6[%c0_21, %c0_22] : memref<1x32xf32, #tpu.memory_space<vmem>>, vector<1x32xf32>
      %35 = vector.shape_cast %34 : vector<1x32xf32> to vector<32xf32>
      %36 = vector.shape_cast %35 : vector<32xf32> to vector<1x32xf32>
      %37 = vector.broadcast %36 : vector<1x32xf32> to vector<16x32xf32>
      %38 = arith.addf %33, %37 : vector<16x32xf32>
      %c0_23 = arith.constant 0 : index
      %c0_24 = arith.constant 0 : index
      %39 = vector.load %arg7[%c0_23, %c0_24] : memref<16x32xf32, #tpu.memory_space<vmem>>, vector<16x32xf32>
      tpu.vector_store %arg7[%c0_23, %c0_24], %38 {strides = array<i32>} : memref<16x32xf32, #tpu.memory_space<vmem>>, vector<16x32xf32>,
    } else {
    }
    return
  }
  func.func @transform_0(%arg0: i32, %arg1: i32) -> (i32, i32) {
    %c0_i32 = arith.constant 0 : i32
    %c0_i32_0 = arith.constant 0 : i32
    return %arg0, %c0_i32 : i32, i32
  }
  func.func @transform_1(%arg0: i32, %arg1: i32) -> (i32, i32) {
    %c0_i32 = arith.constant 0 : i32
    %c0_i32_0 = arith.constant 0 : i32
    return %c0_i32, %arg1 : i32, i32
  }
  func.func @transform_2(%arg0: i32, %arg1: i32) -> (i32, i32) {
    %c0_i32 = arith.constant 0 : i32
    %c0_i32_0 = arith.constant 0 : i32
    return %c0_i32, %arg1 : i32, i32
  }
  func.func @transform_3(%arg0: i32, %arg1: i32) -> (i32, i32) {
    %c0_i32 = arith.constant 0 : i32
    %c0_i32_0 = arith.constant 0 : i32
    return %arg1, %c0_i32 : i32, i32
  }
  func.func @transform_4(%arg0: i32, %arg1: i32) -> (i32, i32) {
    %c0_i32 = arith.constant 0 : i32
    %c0_i32_0 = arith.constant 0 : i32
    %c0_i32_1 = arith.constant 0 : i32
    return %c0_i32, %c0_i32_0 : i32, i32
  }
  func.func @transform_5(%arg0: i32, %arg1: i32) -> (i32, i32) {
    %c0_i32 = arith.constant 0 : i32
    %c0_i32_0 = arith.constant 0 : i32
    return %arg0, %c0_i32 : i32, i32
  }
}

</mosaic_0001>

<llo_original>
// kernel: tpu_custom_call.1
$region0: #{tpu_custom_call.1}
  #allocation0 [shape = 'u32[]', space=smem, size = 0x4, offset = 0x4, fixed_abs, tag = 'smem constant byte address 0x4 - core index']
  #allocation1 [shape = 'u32[144,128]{1,0:T(1,128)}', space=vmem, size = 0x12000, scoped, tag = 'internal scratch']
  %s0 = inlined_call_operand.vmem [shape: bf16[16,32], index: 0, kind: input, shape index: {}]
  %s1 = inlined_call_operand.vmem [shape: bf16[32,128], index: 1, kind: input, shape index: {}]
  %s2 = inlined_call_operand.vmem [shape: f32[1,128], index: 2, kind: input, shape index: {}]
  %s3 = inlined_call_operand.vmem [shape: bf16[128,32], index: 3, kind: input, shape index: {}]
  %s4 = inlined_call_operand.vmem [shape: f32[1,32], index: 4, kind: input, shape index: {}]
  %s5 = inlined_call_operand.hbm [shape: f32[16,32], index: 5, kind: output, shape index: {}]
  %s6 = sld [smem:[#allocation0]]
  $region38: #{tpu_custom_call.1} parent=0
    _
  %s8 = ssub.s32 1, %s6
  %s9 = scalar_select 0, %s8, %s6
  $region1: #{tpu_custom_call.1} parent=0
    #allocation2 [shape = 'u8[8192]{0}', space=vmem, size = 0x2000, scoped, tag = 'output window, operand 0, single buffered']
    #allocation3 [shape = 's32[1]{0}', space=sflag, size = 0x4, scoped, tag = 'scoped memory for tpu_custom_call.1']
    %10 = vsyncpa [#allocation3], 0
    // Predicated region
    $region2: #{tpu_custom_call.1} parent=1 // pred_check
      _
    $region3: #{tpu_custom_call.1} parent=1 // pred_check_branch
      %12 = sbr.rel (0) target = $region5
    $region4: #{tpu_custom_call.1} parent=1 // pred_region
      _
    $region5: #{tpu_custom_call.1} parent=1 // pred_fallthru
      _
    // Predicated region
    $region6: #{tpu_custom_call.1} parent=1 // pred_check
      _
    $region7: #{tpu_custom_call.1} parent=1 // pred_check_branch
      %14 = sbr.rel (0) target = $region9
    $region8: #{tpu_custom_call.1} parent=1 // pred_region
      _
    $region9: #{tpu_custom_call.1} parent=1 // pred_fallthru
      _
    // Predicated region
    $region10: #{tpu_custom_call.1} parent=1 // pred_check
      _
    $region11: #{tpu_custom_call.1} parent=1 // pred_check_branch
      %16 = sbr.rel (0) target = $region13
    $region12: #{tpu_custom_call.1} parent=1 // pred_region
      _
    $region13: #{tpu_custom_call.1} parent=1 // pred_fallthru
      _
    // Predicated region
    $region14: #{tpu_custom_call.1} parent=1 // pred_check
      _
    $region15: #{tpu_custom_call.1} parent=1 // pred_check_branch
      %18 = sbr.rel (0) target = $region17
    $region16: #{tpu_custom_call.1} parent=1 // pred_region
      _
    $region17: #{tpu_custom_call.1} parent=1 // pred_fallthru
      _
    // Predicated region
    $region18: #{tpu_custom_call.1} parent=1 // pred_check
      _
    $region19: #{tpu_custom_call.1} parent=1 // pred_check_branch
      %20 = sbr.rel (0) target = $region21
    $region20: #{tpu_custom_call.1} parent=1 // pred_region
      _
    $region21: #{tpu_custom_call.1} parent=1 // pred_fallthru
      _
    %p22 = scmp.eq.s32.totalorder 0, 0
    // Predicated region
    $region22: #{tpu_custom_call.1} parent=1 // pred_check
      %p23 = pneg %p22
    $region23: #{tpu_custom_call.1} parent=1 // pred_check_branch
      %25 = sbr.rel (%p23) target = $region25
    $region24: #{tpu_custom_call.1} parent=1 // pred_region
      %vm26 = vcmask 261120
      %27 = vst.msk [vmem:[#allocation2] sm:$0xff] %vm26, 0.0
      %28 = vst.msk [vmem:[#allocation2 + $0x8] sm:$0xff] %vm26, 0.0
    $region25: #{tpu_custom_call.1} parent=1 // pred_fallthru
      _
    %v29 = vld [vmem:[%s0] sm:$0xf]
    %v30 = vld [vmem:[%s0 + $0x4] sm:$0xf]
    %v31 = vld [vmem:[%s1] sm:$0xf]
    %v32 = vld [vmem:[%s1 + $0x4] sm:$0xf]
    %v33 = vld [vmem:[%s1 + $0x8] sm:$0xf]
    %v34 = vld [vmem:[%s1 + $0xc] sm:$0xf]
    %v35 = vld [vmem:[%s2] sm:$0x1]
    %v37 = vlaneseq
    %v38 = vshrl.u32 %v37, 7
    %v39 = vsub.s32 0, %v38
    %v40 = vrot.slane %v35, %v39
    %v44 = vunpack.c.l.b16 %v29
    %v45 = vunpack.c.l.b16 %v30
    %v46 = vpack.c.b16 %v45, %v44
    %v51 = vunpack.c.l.b16 %v31
    %v52 = vunpack.c.l.b16 %v32
    %v53 = vunpack.c.l.b16 %v33
    %v54 = vunpack.c.l.b16 %v34
    %v55 = vpack.c.b16 %v52, %v51
    %v56 = vpack.c.b16 %v54, %v53
    %vm59 = vcmask 261120
    %v61 = vsel %vm59, %v46, 0
    %63 = vmatprep.subr.bf16.mxu0 0
    %64 = vmatpush1.bf16.msra.mxu0 0
    %65 = vmatprep.subr.bf16.mxu0 0
    %66 = vmatpush1.bf16.msra.mxu0 0
    %67 = vmatprep.subr.bf16.mxu0 0
    %68 = vmatpush1.bf16.msra.mxu0 0
    %69 = vmatprep.subr.bf16.mxu0 0
    %70 = vmatpush1.bf16.msra.mxu0 0
    %71 = vmatprep.subr.bf16.mxu0 0
    %72 = vmatpush1.bf16.msra.mxu0 0
    %73 = vmatprep.subr.bf16.mxu0 0
    %74 = vmatpush1.bf16.msra.mxu0 0
    %75 = vmatprep.subr.bf16.mxu0 0
    %76 = vmatpush1.bf16.msra.mxu0 %v56
    %77 = vmatprep.subr.bf16.mxu0 0
    %78 = vmatpush1.bf16.msra.mxu0 %v55
    %79 = vmatprep.subr.bf16.mxu0 0
    %80 = vmatpush2.bf16.msra.mxu0 0
    %81 = vmatprep.subr.bf16.mxu0 0
    %82 = vmatpush2.bf16.msra.mxu0 0
    %83 = vmatprep.subr.bf16.mxu0 0
    %84 = vmatpush2.bf16.msra.mxu0 0
    %85 = vmatprep.subr.bf16.mxu0 0
    %86 = vmatpush2.bf16.msra.mxu0 0
    %87 = vmatprep.subr.bf16.mxu0 0
    %88 = vmatpush2.bf16.msra.mxu0 0
    %89 = vmatprep.subr.bf16.mxu0 0
    %90 = vmatpush2.bf16.msra.mxu0 0
    %91 = vmatprep.subr.bf16.mxu0 0
    %92 = vmatpush2.bf16.msra.mxu0 0
    %93 = vmatprep.subr.bf16.mxu0 0
    %94 = vmatpush2.bf16.msra.mxu0 0
    %95 = vmatprep.mubr.bf16.mxu0 0
    %96 = vmatmul.mubr.bf16.gmra.mxu0 %v61
    %v97 = vpop.f32.mrf.mxu0
    %v98 = vadd.f32 %v40, %v97
    %v99 = vpop.f32.mrf.mxu0
    %v100 = vpop.f32.mrf.mxu0
    %v101 = vadd.f32 %v40, %v100
    %v102 = vpop.f32.mrf.mxu0
    %103 = vdwg.mxu0
    %v104 = vmul.f32 %v98, 0.5
    %v105 = vmul.f32 %v101, 0.5
    %v106 = vmul.f32 %v98, 0.044715
    %v107 = vmul.f32 %v101, 0.044715
    %v108 = vmul.f32 %v106, %v98
    %v109 = vmul.f32 %v107, %v101
    %v110 = vmul.f32 %v108, %v98
    %v111 = vmul.f32 %v109, %v101
    %v112 = vadd.f32 %v98, %v110
    %v113 = vadd.f32 %v101, %v111
    %v114 = vmul.f32 %v112, 0.7978846
    %v115 = vmul.f32 %v113, 0.7978846
    %v116 = vtanh.pop %v114
    %v117 = vtanh.pop %v115
    %v118 = vadd.f32 %v116, 1.0
    %v119 = vadd.f32 %v117, 1.0
    %v120 = vmul.f32 %v104, %v118
    %v121 = vmul.f32 %v105, %v119
    %v122 = vld [vmem:[#allocation2] sm:$0xff]
    %v123 = vld [vmem:[#allocation2 + $0x8] sm:$0xff]
    %v124 = vpack.c.bf16 %v121, %v120
    %v125 = vld [vmem:[%s3] sm:$0xf]
    %v126 = vld [vmem:[%s3 + $0x4] sm:$0xf]
    %v127 = vld [vmem:[%s3 + $0x8] sm:$0xf]
    %v128 = vld [vmem:[%s3 + $0xc] sm:$0xf]
    %v129 = vld [vmem:[%s3 + $0x10] sm:$0xf]
    %v130 = vld [vmem:[%s3 + $0x14] sm:$0xf]
    %v131 = vld [vmem:[%s3 + $0x18] sm:$0xf]
    %v132 = vld [vmem:[%s3 + $0x1c] sm:$0xf]
    %v133 = vld [vmem:[%s3 + $0x20] sm:$0xf]
    %v134 = vld [vmem:[%s3 + $0x24] sm:$0xf]
    %v135 = vld [vmem:[%s3 + $0x28] sm:$0xf]
    %v136 = vld [vmem:[%s3 + $0x2c] sm:$0xf]
    %v137 = vld [vmem:[%s3 + $0x30] sm:$0xf]
    %v138 = vld [vmem:[%s3 + $0x34] sm:$0xf]
    %v139 = vld [vmem:[%s3 + $0x38] sm:$0xf]
    %v140 = vld [vmem:[%s3 + $0x3c] sm:$0xf]
    %v157 = vunpack.c.l.b16 %v125
    %v158 = vunpack.c.l.b16 %v126
    %v159 = vunpack.c.l.b16 %v127
    %v160 = vunpack.c.l.b16 %v128
    %v161 = vunpack.c.l.b16 %v129
    %v162 = vunpack.c.l.b16 %v130
    %v163 = vunpack.c.l.b16 %v131
    %v164 = vunpack.c.l.b16 %v132
    %v165 = vunpack.c.l.b16 %v133
    %v166 = vunpack.c.l.b16 %v134
    %v167 = vunpack.c.l.b16 %v135
    %v168 = vunpack.c.l.b16 %v136
    %v169 = vunpack.c.l.b16 %v137
    %v170 = vunpack.c.l.b16 %v138
    %v171 = vunpack.c.l.b16 %v139
    %v172 = vunpack.c.l.b16 %v140
    %v173 = vpack.c.b16 %v158, %v157
    %v174 = vpack.c.b16 %v160, %v159
    %v175 = vpack.c.b16 %v162, %v161
    %v176 = vpack.c.b16 %v164, %v163
    %v177 = vpack.c.b16 %v166, %v165
    %v178 = vpack.c.b16 %v168, %v167
    %v179 = vpack.c.b16 %v170, %v169
    %v180 = vpack.c.b16 %v172, %v171
    %189 = vmatprep.subr.bf16.mxu0 0
    %190 = vmatpush1.bf16.msra.mxu0 %v180
    %191 = vmatprep.subr.bf16.mxu0 0
    %192 = vmatpush1.bf16.msra.mxu0 %v179
    %193 = vmatprep.subr.bf16.mxu0 0
    %194 = vmatpush1.bf16.msra.mxu0 %v178
    %195 = vmatprep.subr.bf16.mxu0 0
    %196 = vmatpush1.bf16.msra.mxu0 %v177
    %197 = vmatprep.subr.bf16.mxu0 0
    %198 = vmatpush1.bf16.msra.mxu0 %v176
    %199 = vmatprep.subr.bf16.mxu0 0
    %200 = vmatpush1.bf16.msra.mxu0 %v175
    %201 = vmatprep.subr.bf16.mxu0 0
    %202 = vmatpush1.bf16.msra.mxu0 %v174
    %203 = vmatprep.subr.bf16.mxu0 0
    %204 = vmatpush1.bf16.msra.mxu0 %v173
    %205 = vmatprep.subr.bf16.mxu0 0
    %206 = vmatpush2.bf16.msra.mxu0 0
    %207 = vmatprep.subr.bf16.mxu0 0
    %208 = vmatpush2.bf16.msra.mxu0 0
    %209 = vmatprep.subr.bf16.mxu0 0
    %210 = vmatpush2.bf16.msra.mxu0 0
    %211 = vmatprep.subr.bf16.mxu0 0
    %212 = vmatpush2.bf16.msra.mxu0 0
    %213 = vmatprep.subr.bf16.mxu0 0
    %214 = vmatpush2.bf16.msra.mxu0 0
    %215 = vmatprep.subr.bf16.mxu0 0
    %216 = vmatpush2.bf16.msra.mxu0 0
    %217 = vmatprep.subr.bf16.mxu0 0
    %218 = vmatpush2.bf16.msra.mxu0 0
    %219 = vmatprep.subr.bf16.mxu0 0
    %220 = vmatpush2.bf16.msra.mxu0 0
    %221 = vmatprep.mubr.bf16.mxu0 0
    %222 = vmatmul.mubr.bf16.gmra.mxu0 %v124
    %v223 = vpop.f32.mrf.mxu0
    %v224 = vadd.f32 0.0, %v223
    %v225 = vpop.f32.mrf.mxu0
    %v226 = vpop.f32.mrf.mxu0
    %v227 = vadd.f32 0.0, %v226
    %v228 = vpop.f32.mrf.mxu0
    %229 = vdwg.mxu0
    %v230 = vadd.f32 %v122, %v224
    %v231 = vadd.f32 %v123, %v227
    %232 = vst.msk [vmem:[#allocation2] sm:$0xff] %vm59, %v230
    %233 = vst.msk [vmem:[#allocation2 + $0x8] sm:$0xff] %vm59, %v231
    // Predicated region
    $region26: #{tpu_custom_call.1} parent=1 // pred_check
      %p234 = pneg %p22
    $region27: #{tpu_custom_call.1} parent=1 // pred_check_branch
      %236 = sbr.rel (%p234) target = $region29
    $region28: #{tpu_custom_call.1} parent=1 // pred_region
      %v237 = vld [vmem:[#allocation2] sm:$0xff]
      %v238 = vld [vmem:[#allocation2 + $0x8] sm:$0xff]
      %v239 = vld [vmem:[%s4] sm:$0x1]
      %v241 = vlaneseq
      %v242 = vshrl.u32 %v241, 7
      %v243 = vsub.s32 0, %v242
      %v244 = vrot.slane %v239, %v243
      %v246 = vadd.f32 %v237, %v244
      %v247 = vadd.f32 %v238, %v244
      %248 = vst.msk [vmem:[#allocation2] sm:$0xff] %vm59, %v246
      %249 = vst.msk [vmem:[#allocation2 + $0x8] sm:$0xff] %vm59, %v247
    $region29: #{tpu_custom_call.1} parent=1 // pred_fallthru
      _
    // Predicated region
    $region30: #{tpu_custom_call.1} parent=1 // pred_check
      _
    $region31: #{tpu_custom_call.1} parent=1 // pred_check_branch
      %251 = sbr.rel (0) target = $region33
    $region32: #{tpu_custom_call.1} parent=1 // pred_region
      %s253 = ssub.s32 256, 256
      %254 = vsyncadd [#allocation3], %s253
      %s255 = sshll.u32 [#allocation2], 4
      %s256 = int_to_ptr.vmem [resolvable:$true] %s255
      %261 = dma.vmem_to_hbm [thread:$0]  %s256, 256, %s5, [#allocation3], 128, 128, 8
    $region33: #{tpu_custom_call.1} parent=1 // pred_fallthru
      _
    // Predicated region
    $region34: #{tpu_custom_call.1} parent=1 // pred_check
      _
    $region35: #{tpu_custom_call.1} parent=1 // pred_check_branch
      %263 = sbr.rel (0) target = $region37
    $region36: #{tpu_custom_call.1} parent=1 // pred_region
      %264 = dma.done [#allocation3], 256
    $region37: #{tpu_custom_call.1} parent=1 // pred_fallthru
      _
    %265 = vsyncpa [#allocation3], 1

</llo_original>
